<compile_context>
chip_gen: v7x
topology: tpu7x:2x2x1
jax: 0.10.0
libtpu: 0.0.40
codegen_flags: <defaults>
</compile_context>

<pallas_src>
import functools

import jax
import jax.numpy as jnp
from jax.experimental import pallas as pl
from jax.experimental.pallas import tpu as pltpu


def _round_up(x, m):
    return ((x + m - 1) // m) * m


# --------------------------- fused kernel ----------------------------------

def _double_q_fused_kernel(s_ref, w_ref, b_ref, q_ref, *, s_pad, wpad, out_cols):
    # Static, sublane-aligned row slices of the packed bf16 weight slab.
    r1 = s_pad            # end of W1 rows
    r2 = r1 + wpad        # end of W2 rows
    r3 = r2 + wpad        # end of W3 rows
    w1 = w_ref[0:r1, :]   # (s_pad, wpad) bf16  [W11 | W21]
    w2 = w_ref[r1:r2, :]  # (wpad, wpad) bf16   blockdiag(W12, W22)
    w3 = w_ref[r2:r3, :]  # (wpad, wpad) bf16   blockdiag(W13, W23)

    b1 = b_ref[0:1, :]    # (1, wpad) f32
    b2 = b_ref[1:2, :]
    b3 = b_ref[2:3, :]

    # bf16 MXU operands, f32 accumulate; bias add / ReLU in f32.
    s = s_ref[...].astype(jnp.bfloat16)
    h = jnp.dot(s, w1, preferred_element_type=jnp.float32) + b1
    h = jnp.maximum(h, 0.0)
    h = jnp.dot(h.astype(jnp.bfloat16), w2, preferred_element_type=jnp.float32) + b2
    h = jnp.maximum(h, 0.0)
    q = jnp.dot(h.astype(jnp.bfloat16), w3, preferred_element_type=jnp.float32) + b3

    # Narrow store: only the 2*action_dim useful columns go back to HBM.
    q_ref[...] = q[:, :out_cols]


# ----------------------- one-time parameter packing ------------------------

def pack_double_q_params(params_q1, params_q2):
    """Pack both Q heads once.  Call when params change, NOT per forward.

    Returns (w_slab bf16 (s_pad + 2*wpad, wpad), bias f32 (8, wpad), dims dict).
    """
    (w11, b11), (w12, b12), (w13, b13) = params_q1
    (w21, b21), (w22, b22), (w23, b23) = params_q2
    state_dim = w11.shape[0]
    h1 = w11.shape[1]
    h2 = w12.shape[1]
    a = w13.shape[1]

    s_pad = _round_up(state_dim, 8)
    # Multiple of 128 keeps both heads sharing one MXU pass per layer
    # (128 fills a v5e MXU tile; larger hid_shape rounds cleanly to 256 for
    # the v6e/v7x 256x256 MXU).
    wpad = _round_up(max(2 * h1, 2 * h2, 2 * a), 128)

    # Layer 1: columns [0:h1] -> Q1, [h1:2h1] -> Q2.
    w1p = jnp.zeros((s_pad, wpad), jnp.float32)
    w1p = w1p.at[:state_dim, :h1].set(w11).at[:state_dim, h1:2 * h1].set(w21)
    # Layers 2/3: block-diagonal (zero padding never contaminates real columns).
    w2p = jnp.zeros((wpad, wpad), jnp.float32)
    w2p = w2p.at[:h1, :h2].set(w12).at[h1:2 * h1, h2:2 * h2].set(w22)
    w3p = jnp.zeros((wpad, wpad), jnp.float32)
    w3p = w3p.at[:h2, :a].set(w13).at[h2:2 * h2, a:2 * a].set(w23)
    w_slab = jnp.concatenate([w1p, w2p, w3p], axis=0).astype(jnp.bfloat16)

    bias = jnp.zeros((8, wpad), jnp.float32)
    bias = bias.at[0, :h1].set(b11.reshape(-1)).at[0, h1:2 * h1].set(b21.reshape(-1))
    bias = bias.at[1, :h2].set(b12.reshape(-1)).at[1, h2:2 * h2].set(b22.reshape(-1))
    bias = bias.at[2, :a].set(b13.reshape(-1)).at[2, a:2 * a].set(b23.reshape(-1))

    dims = dict(state_dim=state_dim, action_dim=a, s_pad=s_pad, wpad=wpad)
    return w_slab, bias, dims


# ------------------------------ hot path -----------------------------------

@functools.partial(
    jax.jit,
    static_argnames=("state_dim", "action_dim", "s_pad", "wpad", "block_b"))
def _double_q_forward_impl(s, w_slab, bias, *, state_dim, action_dim, s_pad,
                           wpad, block_b):
    B = s.shape[0]
    out_cols = 2 * action_dim

    # Pad the feature axis (zero columns hit zero weight rows -> no effect).
    if s_pad != state_dim:
        s = jnp.pad(s, ((0, 0), (0, s_pad - state_dim)))

    # Batch tiling (megacore-aware):
    #  - tiny B: one full-dim block (legal since block dim == full array dim)
    #  - moderate B: split into 2 "parallel" steps so both v7x TCs are busy
    #  - large B: block_b-sized tiles, software-pipelined
    if B <= 16:
        tb = B
        b_pad = B
    elif B <= block_b:
        tb = _round_up(-(-B // 2), 8)   # ceil(B/2) rounded up to 8
        b_pad = 2 * tb
    else:
        tb = block_b
        b_pad = _round_up(B, tb)
    if b_pad != B:
        s = jnp.pad(s, ((0, b_pad - B), (0, 0)))
    nb = b_pad // tb

    slab_rows = w_slab.shape[0]
    kernel = functools.partial(_double_q_fused_kernel,
                               s_pad=s_pad, wpad=wpad, out_cols=out_cols)

    q = pl.pallas_call(
        kernel,
        out_shape=jax.ShapeDtypeStruct((b_pad, out_cols), jnp.float32),
        grid=(nb,),
        in_specs=[
            pl.BlockSpec((tb, s_pad), lambda i: (i, 0)),          # activations
            pl.BlockSpec((slab_rows, wpad), lambda i: (0, 0)),    # weights (VMEM-resident)
            pl.BlockSpec((8, wpad), lambda i: (0, 0)),            # biases (VMEM-resident)
        ],
        out_specs=pl.BlockSpec((tb, out_cols), lambda i: (i, 0)),
        compiler_params=pltpu.CompilerParams(
            dimension_semantics=("parallel",)),
    )(s, w_slab, bias)

    q1 = q[:B, :action_dim]
    q2 = q[:B, action_dim:out_cols]
    return q1, q2


def double_q_forward(s, packed, *, block_b=2048):
    """packed = pack_double_q_params(params_q1, params_q2)."""
    w_slab, bias, dims = packed
    return _double_q_forward_impl(
        s, w_slab, bias,
        state_dim=dims["state_dim"], action_dim=dims["action_dim"],
        s_pad=dims["s_pad"], wpad=dims["wpad"], block_b=block_b)


# ----------------------- init / reference (pure JAX) -----------------------

def _init_linear(key, fan_in, fan_out):
    # Mimics PyTorch Linear default: uniform(-1/sqrt(in), 1/sqrt(in)).
    kw, kb = jax.random.split(key)
    bound = 1.0 / jnp.sqrt(jnp.float32(fan_in))
    w = jax.random.uniform(kw, (fan_in, fan_out), jnp.float32, -bound, bound)
    b = jax.random.uniform(kb, (1, fan_out), jnp.float32, -bound, bound)
    return w, b


def _init_mlp(key, layer_shape):
    keys = jax.random.split(key, len(layer_shape) - 1)
    return [_init_linear(k, layer_shape[j], layer_shape[j + 1])
            for j, k in enumerate(keys)]


def _reference_forward(s, params):
    h = s
    n = len(params)
    for j, (w, b) in enumerate(params):
        h = h @ w + b
        if j < n - 1:
            h = jnp.maximum(h, 0.0)
    return h


if __name__ == "__main__":
    # Shapes consistent with Double_Q_Net(state_dim, action_dim, hid_shape)
    state_dim, action_dim = 8, 4
    hid_shape = (32, 32)
    layer_shape = [state_dim] + list(hid_shape) + [action_dim]

    key = jax.random.PRNGKey(0)
    k_s, k_q1, k_q2, k_big = jax.random.split(key, 4)

    params_q1 = _init_mlp(k_q1, layer_shape)
    params_q2 = _init_mlp(k_q2, layer_shape)

    # Pack once (hot path is then a single pallas_call).
    packed = pack_double_q_params(params_q1, params_q2)
    jax.block_until_ready(packed[:2])

    # bf16 matmul operands -> loosen tolerance vs the f32 reference.
    TOL = dict(atol=3e-2, rtol=3e-2)

    # --- small batch (single full-dim block) ---
    batch = 2
    s = jax.random.normal(k_s, (batch, state_dim), jnp.float32)
    q1, q2 = double_q_forward(s, packed)
    jax.block_until_ready((q1, q2))

    ref_q1 = _reference_forward(s, params_q1)
    ref_q2 = _reference_forward(s, params_q2)
    assert q1.shape == (batch, action_dim) and q2.shape == (batch, action_dim)
    assert jnp.allclose(q1, ref_q1, **TOL)
    assert jnp.allclose(q2, ref_q2, **TOL)

    # --- larger batch (2-step "parallel" grid, padded batch) ---
    big_batch = 1000
    s_big = jax.random.normal(k_big, (big_batch, state_dim), jnp.float32)
    q1b, q2b = double_q_forward(s_big, packed)
    jax.block_until_ready((q1b, q2b))

    ref_q1b = _reference_forward(s_big, params_q1)
    ref_q2b = _reference_forward(s_big, params_q2)
    assert q1b.shape == (big_batch, action_dim)
    assert q2b.shape == (big_batch, action_dim)
    assert jnp.allclose(q1b, ref_q1b, **TOL)
    assert jnp.allclose(q2b, ref_q2b, **TOL)

    # --- very large batch (block_b-tiled pipelined path) ---
    huge_batch = 5000
    s_huge = jax.random.normal(k_big, (huge_batch, state_dim), jnp.float32)
    q1h, q2h = double_q_forward(s_huge, packed)
    jax.block_until_ready((q1h, q2h))
    assert jnp.allclose(q1h, _reference_forward(s_huge, params_q1), **TOL)
    assert jnp.allclose(q2h, _reference_forward(s_huge, params_q2), **TOL)

    print("KERNEL_OK")
</pallas_src>

<mosaic_0001>
module attributes {stable_mosaic.version = 11 : i64} {
  func.func @_double_q_fused_kernel(%arg0: i32, %arg1: memref<2x8xf32, #tpu.memory_space<vmem>>, %arg2: memref<264x128xbf16, #tpu.memory_space<vmem>>, %arg3: memref<8x128xf32, #tpu.memory_space<vmem>>, %arg4: memref<2x8xf32, #tpu.memory_space<vmem>>) attributes {dimension_semantics = [#tpu.dimension_semantics<parallel>], iteration_bounds = array<i64: 1>, scalar_prefetch = 0 : i64, scratch_operands = 0 : i64, tpu.core_type = #tpu.core_type<tc>, window_params = [{transform_indices = @transform_0, window_bounds = array<i64: 2, 8>}, {pipeline_mode = #tpu.pipeline_mode<synchronous>, transform_indices = @transform_1, window_bounds = array<i64: 264, 128>}, {pipeline_mode = #tpu.pipeline_mode<synchronous>, transform_indices = @transform_2, window_bounds = array<i64: 8, 128>}, {transform_indices = @transform_3, window_bounds = array<i64: 2, 8>}]} {
    %c0 = arith.constant 0 : index
    %c0_0 = arith.constant 0 : index
    %0 = vector.load %arg2[%c0, %c0_0] : memref<264x128xbf16, #tpu.memory_space<vmem>>, vector<8x128xbf16>
    %c8 = arith.constant 8 : index
    %c0_1 = arith.constant 0 : index
    %1 = vector.load %arg2[%c8, %c0_1] : memref<264x128xbf16, #tpu.memory_space<vmem>>, vector<128x128xbf16>
    %c136 = arith.constant 136 : index
    %c0_2 = arith.constant 0 : index
    %2 = vector.load %arg2[%c136, %c0_2] : memref<264x128xbf16, #tpu.memory_space<vmem>>, vector<128x128xbf16>
    %c0_3 = arith.constant 0 : index
    %c0_4 = arith.constant 0 : index
    %3 = vector.load %arg3[%c0_3, %c0_4] : memref<8x128xf32, #tpu.memory_space<vmem>>, vector<1x128xf32>
    %c1 = arith.constant 1 : index
    %c0_5 = arith.constant 0 : index
    %4 = vector.load %arg3[%c1, %c0_5] : memref<8x128xf32, #tpu.memory_space<vmem>>, vector<1x128xf32>
    %c2 = arith.constant 2 : index
    %c0_6 = arith.constant 0 : index
    %5 = vector.load %arg3[%c2, %c0_6] : memref<8x128xf32, #tpu.memory_space<vmem>>, vector<1x128xf32>
    %c0_7 = arith.constant 0 : index
    %c0_8 = arith.constant 0 : index
    %6 = vector.load %arg1[%c0_7, %c0_8] : memref<2x8xf32, #tpu.memory_space<vmem>>, vector<2x8xf32>
    %7 = arith.truncf %6 : vector<2x8xf32> to vector<2x8xbf16>
    %cst = arith.constant dense<0.000000e+00> : vector<2x128xf32>
    %8 = tpu.matmul %7, %0, %cst {dimension_numbers = #tpu.dot_dimension_numbers<[1], [0], [0], [1], [0, 0, 1, 1], [], []>} : vector<2x8xbf16>, vector<8x128xbf16>, vector<2x128xf32> -> vector<2x128xf32>
    %9 = vector.broadcast %3 : vector<1x128xf32> to vector<2x128xf32>
    %10 = arith.addf %8, %9 : vector<2x128xf32>
    %cst_9 = arith.constant 0.000000e+00 : f32
    %11 = vector.broadcast %cst_9 : f32 to vector<2x128xf32>
    %12 = arith.maximumf %10, %11 : vector<2x128xf32>
    %13 = arith.truncf %12 : vector<2x128xf32> to vector<2x128xbf16>
    %cst_10 = arith.constant dense<0.000000e+00> : vector<2x128xf32>
    %14 = tpu.matmul %13, %1, %cst_10 {dimension_numbers = #tpu.dot_dimension_numbers<[1], [0], [0], [1], [0, 0, 1, 1], [], []>} : vector<2x128xbf16>, vector<128x128xbf16>, vector<2x128xf32> -> vector<2x128xf32>
    %15 = vector.broadcast %4 : vector<1x128xf32> to vector<2x128xf32>
    %16 = arith.addf %14, %15 : vector<2x128xf32>
    %cst_11 = arith.constant 0.000000e+00 : f32
    %17 = vector.broadcast %cst_11 : f32 to vector<2x128xf32>
    %18 = arith.maximumf %16, %17 : vector<2x128xf32>
    %19 = arith.truncf %18 : vector<2x128xf32> to vector<2x128xbf16>
    %cst_12 = arith.constant dense<0.000000e+00> : vector<2x128xf32>
    %20 = tpu.matmul %19, %2, %cst_12 {dimension_numbers = #tpu.dot_dimension_numbers<[1], [0], [0], [1], [0, 0, 1, 1], [], []>} : vector<2x128xbf16>, vector<128x128xbf16>, vector<2x128xf32> -> vector<2x128xf32>
    %21 = vector.broadcast %5 : vector<1x128xf32> to vector<2x128xf32>
    %22 = arith.addf %20, %21 : vector<2x128xf32>
    %23 = vector.extract_strided_slice %22 {offsets = [0, 0], sizes = [2, 8], strides = [1, 1]} : vector<2x128xf32> to vector<2x8xf32>
    %c0_13 = arith.constant 0 : index
    %c0_14 = arith.constant 0 : index
    %24 = vector.load %arg4[%c0_13, %c0_14] : memref<2x8xf32, #tpu.memory_space<vmem>>, vector<2x8xf32>
    tpu.vector_store %arg4[%c0_13, %c0_14], %23 {strides = array<i32>} : memref<2x8xf32, #tpu.memory_space<vmem>>, vector<2x8xf32>,
    return
  }
  func.func @transform_0(%arg0: i32) -> (i32, i32) {
    %c0_i32 = arith.constant 0 : i32
    %c0_i32_0 = arith.constant 0 : i32
    return %arg0, %c0_i32 : i32, i32
  }
  func.func @transform_1(%arg0: i32) -> (i32, i32) {
    %c0_i32 = arith.constant 0 : i32
    %c0_i32_0 = arith.constant 0 : i32
    %c0_i32_1 = arith.constant 0 : i32
    return %c0_i32, %c0_i32_0 : i32, i32
  }
  func.func @transform_2(%arg0: i32) -> (i32, i32) {
    %c0_i32 = arith.constant 0 : i32
    %c0_i32_0 = arith.constant 0 : i32
    %c0_i32_1 = arith.constant 0 : i32
    return %c0_i32, %c0_i32_0 : i32, i32
  }
  func.func @transform_3(%arg0: i32) -> (i32, i32) {
    %c0_i32 = arith.constant 0 : i32
    %c0_i32_0 = arith.constant 0 : i32
    return %arg0, %c0_i32 : i32, i32
  }
}

</mosaic_0001>

<llo_original>
// kernel: _double_q_forward_impl.1
$region0: #{_double_q_forward_impl.1}
  #allocation0 [shape = 'u32[]', space=smem, size = 0x4, offset = 0x4, fixed_abs, tag = 'smem constant byte address 0x4 - core index']
  #allocation1 [shape = 'u32[144,128]{1,0:T(1,128)}', space=vmem, size = 0x12000, scoped, tag = 'internal scratch']
  %s0 = inlined_call_operand.hbm [shape: f32[2,8], index: 0, kind: input, shape index: {}]
  %s1 = inlined_call_operand.hbm [shape: bf16[264,128], index: 1, kind: input, shape index: {}]
  %s2 = inlined_call_operand.hbm [shape: f32[8,128], index: 2, kind: input, shape index: {}]
  %s3 = inlined_call_operand.vmem [shape: f32[2,8], index: 3, kind: output, shape index: {}]
  %s4 = sld [smem:[#allocation0]]
  $region34: #{_double_q_forward_impl.1} parent=0
    _
  %s6 = ssub.s32 1, %s4
  %s7 = scalar_select 0, %s6, %s4
  $region1: #{_double_q_forward_impl.1} parent=0
    #allocation2 [shape = 'u8[1024]{0}', space=vmem, size = 0x400, scoped, tag = 'input window, operand 0, single buffered']
    #allocation3 [shape = 's32[1]{0}', space=sflag, size = 0x4, scoped, tag = 'scoped memory for _double_q_forward_impl.1']
    #allocation4 [shape = 'u8[67584]{0}', space=vmem, size = 0x10800, scoped, tag = 'input window, operand 1, single buffered']
    #allocation5 [shape = 's32[1]{0}', space=sflag, size = 0x4, scoped, tag = 'scoped memory for _double_q_forward_impl.1']
    #allocation6 [shape = 'u8[4096]{0}', space=vmem, size = 0x1000, scoped, tag = 'input window, operand 2, single buffered']
    %8 = vsyncpa [#allocation3], 0
    %9 = vsyncpa [#allocation5], 0
    // Predicated region
    $region2: #{_double_q_forward_impl.1} parent=1 // pred_check
      _
    $region3: #{_double_q_forward_impl.1} parent=1 // pred_check_branch
      %11 = sbr.rel (0) target = $region5
    $region4: #{_double_q_forward_impl.1} parent=1 // pred_region
      %s13 = ssub.s32 32, 32
      %14 = vsyncadd [#allocation3], %s13
      %s16 = sshll.u32 [#allocation2], 4
      %s17 = int_to_ptr.vmem [resolvable:$true] %s16
      %19 = dma.hbm_to_vmem [thread:$0]  %s0, 32, %s17, [#allocation3]
    $region5: #{_double_q_forward_impl.1} parent=1 // pred_fallthru
      _
    // Predicated region
    $region6: #{_double_q_forward_impl.1} parent=1 // pred_check
      _
    $region7: #{_double_q_forward_impl.1} parent=1 // pred_check_branch
      %21 = sbr.rel (0) target = $region9
    $region8: #{_double_q_forward_impl.1} parent=1 // pred_region
      %s23 = ssub.s32 2112, 2112
      %24 = vsyncadd [#allocation5], %s23
      %s25 = sshll.u32 [#allocation4], 4
      %s26 = int_to_ptr.vmem [resolvable:$true] %s25
      %31 = dma.hbm_to_vmem [thread:$0]  %s1, 2112, %s26, [#allocation5], 64, 64, 4
    $region9: #{_double_q_forward_impl.1} parent=1 // pred_fallthru
      _
    // Predicated region
    $region10: #{_double_q_forward_impl.1} parent=1 // pred_check
      _
    $region11: #{_double_q_forward_impl.1} parent=1 // pred_check_branch
      %33 = sbr.rel (0) target = $region13
    $region12: #{_double_q_forward_impl.1} parent=1 // pred_region
      %s35 = ssub.s32 128, 128
      %36 = vsyncadd [#allocation5], %s35
      %s38 = sshll.u32 [#allocation6], 4
      %s39 = int_to_ptr.vmem [resolvable:$true] %s38
      %41 = dma.hbm_to_vmem [thread:$0]  %s2, 128, %s39, [#allocation5]
    $region13: #{_double_q_forward_impl.1} parent=1 // pred_fallthru
      _
    // Predicated region
    $region14: #{_double_q_forward_impl.1} parent=1 // pred_check
      _
    $region15: #{_double_q_forward_impl.1} parent=1 // pred_check_branch
      %43 = sbr.rel (0) target = $region17
    $region16: #{_double_q_forward_impl.1} parent=1 // pred_region
      %44 = dma.done [#allocation3], 32
    $region17: #{_double_q_forward_impl.1} parent=1 // pred_fallthru
      _
    // Predicated region
    $region18: #{_double_q_forward_impl.1} parent=1 // pred_check
      _
    $region19: #{_double_q_forward_impl.1} parent=1 // pred_check_branch
      %46 = sbr.rel (0) target = $region21
    $region20: #{_double_q_forward_impl.1} parent=1 // pred_region
      %47 = dma.done [#allocation5], 2112
    $region21: #{_double_q_forward_impl.1} parent=1 // pred_fallthru
      _
    // Predicated region
    $region22: #{_double_q_forward_impl.1} parent=1 // pred_check
      _
    $region23: #{_double_q_forward_impl.1} parent=1 // pred_check_branch
      %49 = sbr.rel (0) target = $region25
    $region24: #{_double_q_forward_impl.1} parent=1 // pred_region
      %50 = dma.done [#allocation5], 128
    $region25: #{_double_q_forward_impl.1} parent=1 // pred_fallthru
      _
    %v52 = vld [vmem:[#allocation4] sm:$0xf]
    %v53 = vld [vmem:[#allocation4 + $0x4] sm:$0xf]
    %v54 = vld [vmem:[#allocation4 + $0x8] sm:$0xf]
    %v55 = vld [vmem:[#allocation4 + $0xc] sm:$0xf]
    %v56 = vld [vmem:[#allocation4 + $0x10] sm:$0xf]
    %v57 = vld [vmem:[#allocation4 + $0x14] sm:$0xf]
    %v58 = vld [vmem:[#allocation4 + $0x18] sm:$0xf]
    %v59 = vld [vmem:[#allocation4 + $0x1c] sm:$0xf]
    %v60 = vld [vmem:[#allocation4 + $0x20] sm:$0xf]
    %v61 = vld [vmem:[#allocation4 + $0x24] sm:$0xf]
    %v62 = vld [vmem:[#allocation4 + $0x28] sm:$0xf]
    %v63 = vld [vmem:[#allocation4 + $0x2c] sm:$0xf]
    %v64 = vld [vmem:[#allocation4 + $0x30] sm:$0xf]
    %v65 = vld [vmem:[#allocation4 + $0x34] sm:$0xf]
    %v66 = vld [vmem:[#allocation4 + $0x38] sm:$0xf]
    %v67 = vld [vmem:[#allocation4 + $0x3c] sm:$0xf]
    %v68 = vld [vmem:[#allocation4 + $0x40] sm:$0xf]
    %v69 = vld [vmem:[#allocation4 + $0x44] sm:$0xf]
    %v70 = vld [vmem:[#allocation4 + $0x48] sm:$0xf]
    %v71 = vld [vmem:[#allocation4 + $0x4c] sm:$0xf]
    %v72 = vld [vmem:[#allocation4 + $0x50] sm:$0xf]
    %v73 = vld [vmem:[#allocation4 + $0x54] sm:$0xf]
    %v74 = vld [vmem:[#allocation4 + $0x58] sm:$0xf]
    %v75 = vld [vmem:[#allocation4 + $0x5c] sm:$0xf]
    %v76 = vld [vmem:[#allocation4 + $0x60] sm:$0xf]
    %v77 = vld [vmem:[#allocation4 + $0x64] sm:$0xf]
    %v78 = vld [vmem:[#allocation4 + $0x68] sm:$0xf]
    %v79 = vld [vmem:[#allocation4 + $0x6c] sm:$0xf]
    %v80 = vld [vmem:[#allocation4 + $0x70] sm:$0xf]
    %v81 = vld [vmem:[#allocation4 + $0x74] sm:$0xf]
    %v82 = vld [vmem:[#allocation4 + $0x78] sm:$0xf]
    %v83 = vld [vmem:[#allocation4 + $0x7c] sm:$0xf]
    %v84 = vld [vmem:[#allocation4 + $0x80] sm:$0xf]
    %v85 = vld [vmem:[#allocation6] sm:$0x1]
    %v86 = vld [vmem:[#allocation6 + $0x1] sm:$0x1]
    %v87 = vld [vmem:[#allocation6 + $0x2] sm:$0x1]
    %v88 = vld [vmem:[#allocation2] sm:$0x3]
    %v89 = vpack.c.bf16 %v88, %v88
    %v90 = vlaneseq
    %v91 = vshrl.u32 %v90, 7
    %v92 = vsub.s32 0, %v91
    %v93 = vrot.slane %v85, %v92
    %vm94 = vcmask 64512
    %v96 = vsel %vm94, %v89, 0
    %vm98 = vcmask 1043456
    %v100 = vsel %vm98, %v52, 0
    %102 = vmatprep.subr.bf16.mxu0 0
    %103 = vmatpush1.bf16.msra.mxu0 %v100
    %104 = vmatprep.subr.bf16.mxu0 0
    %105 = vmatpush1.bf16.msra.mxu0 0
    %106 = vmatprep.subr.bf16.mxu0 0
    %107 = vmatpush1.bf16.msra.mxu0 0
    %108 = vmatprep.subr.bf16.mxu0 0
    %109 = vmatpush1.bf16.msra.mxu0 0
    %110 = vmatprep.subr.bf16.mxu0 0
    %111 = vmatpush1.bf16.msra.mxu0 0
    %112 = vmatprep.subr.bf16.mxu0 0
    %113 = vmatpush1.bf16.msra.mxu0 0
    %114 = vmatprep.subr.bf16.mxu0 0
    %115 = vmatpush1.bf16.msra.mxu0 0
    %116 = vmatprep.subr.bf16.mxu0 0
    %117 = vmatpush1.bf16.msra.mxu0 0
    %118 = vmatprep.subr.bf16.mxu0 0
    %119 = vmatpush1.bf16.msra.mxu0 0
    %120 = vmatprep.subr.bf16.mxu0 0
    %121 = vmatpush1.bf16.msra.mxu0 0
    %122 = vmatprep.subr.bf16.mxu0 0
    %123 = vmatpush1.bf16.msra.mxu0 0
    %124 = vmatprep.subr.bf16.mxu0 0
    %125 = vmatpush1.bf16.msra.mxu0 0
    %126 = vmatprep.subr.bf16.mxu0 0
    %127 = vmatpush1.bf16.msra.mxu0 0
    %128 = vmatprep.subr.bf16.mxu0 0
    %129 = vmatpush1.bf16.msra.mxu0 0
    %130 = vmatprep.subr.bf16.mxu0 0
    %131 = vmatpush1.bf16.msra.mxu0 0
    %132 = vmatprep.subr.bf16.mxu0 0
    %133 = vmatpush1.bf16.msra.mxu0 0
    %134 = vmatprep.mubr.bf16.mxu0 0
    %135 = vmatmul.mubr.bf16.gmra.mrb[0].mxu0 %v96
    %v136 = vpop.f32.mrb[0].mxu0
    %v137 = vadd.f32 %v93, %v136
    %v138 = vpop.f32.mrb[0].mxu0
    %v139 = vpop.f32.mrb[0].mxu0
    %v140 = vpop.f32.mrb[0].mxu0
    %141 = vdwg.mxu0
    %v142 = vmax.f32 %v137, 0.0
    %v143 = vpack.c.bf16 %v142, %v142
    %v144 = vlaneseq
    %v145 = vshrl.u32 %v144, 7
    %v146 = vsub.s32 0, %v145
    %v147 = vrot.slane %v86, %v146
    %v164 = vunpack.c.l.b16 %v53
    %v165 = vunpack.c.l.b16 %v54
    %v166 = vunpack.c.l.b16 %v55
    %v167 = vunpack.c.l.b16 %v56
    %v168 = vunpack.c.l.b16 %v57
    %v169 = vunpack.c.l.b16 %v58
    %v170 = vunpack.c.l.b16 %v59
    %v171 = vunpack.c.l.b16 %v60
    %v172 = vunpack.c.l.b16 %v61
    %v173 = vunpack.c.l.b16 %v62
    %v174 = vunpack.c.l.b16 %v63
    %v175 = vunpack.c.l.b16 %v64
    %v176 = vunpack.c.l.b16 %v65
    %v177 = vunpack.c.l.b16 %v66
    %v178 = vunpack.c.l.b16 %v67
    %v179 = vunpack.c.l.b16 %v68
    %v180 = vpack.c.b16 %v165, %v164
    %v181 = vpack.c.b16 %v167, %v166
    %v182 = vpack.c.b16 %v169, %v168
    %v183 = vpack.c.b16 %v171, %v170
    %v184 = vpack.c.b16 %v173, %v172
    %v185 = vpack.c.b16 %v175, %v174
    %v186 = vpack.c.b16 %v177, %v176
    %v187 = vpack.c.b16 %v179, %v178
    %196 = vmatprep.subr.bf16.mxu0 0
    %197 = vmatpush1.bf16.msra.mxu0 %v180
    %198 = vmatprep.subr.bf16.mxu0 0
    %199 = vmatpush1.bf16.msra.mxu0 %v181
    %200 = vmatprep.subr.bf16.mxu0 0
    %201 = vmatpush1.bf16.msra.mxu0 %v182
    %202 = vmatprep.subr.bf16.mxu0 0
    %203 = vmatpush1.bf16.msra.mxu0 %v183
    %204 = vmatprep.subr.bf16.mxu0 0
    %205 = vmatpush1.bf16.msra.mxu0 %v184
    %206 = vmatprep.subr.bf16.mxu0 0
    %207 = vmatpush1.bf16.msra.mxu0 %v185
    %208 = vmatprep.subr.bf16.mxu0 0
    %209 = vmatpush1.bf16.msra.mxu0 %v186
    %210 = vmatprep.subr.bf16.mxu0 0
    %211 = vmatpush1.bf16.msra.mxu0 %v187
    %212 = vmatprep.subr.bf16.mxu0 0
    %213 = vmatpush1.bf16.msra.mxu0 0
    %214 = vmatprep.subr.bf16.mxu0 0
    %215 = vmatpush1.bf16.msra.mxu0 0
    %216 = vmatprep.subr.bf16.mxu0 0
    %217 = vmatpush1.bf16.msra.mxu0 0
    %218 = vmatprep.subr.bf16.mxu0 0
    %219 = vmatpush1.bf16.msra.mxu0 0
    %220 = vmatprep.subr.bf16.mxu0 0
    %221 = vmatpush1.bf16.msra.mxu0 0
    %222 = vmatprep.subr.bf16.mxu0 0
    %223 = vmatpush1.bf16.msra.mxu0 0
    %224 = vmatprep.subr.bf16.mxu0 0
    %225 = vmatpush1.bf16.msra.mxu0 0
    %226 = vmatprep.subr.bf16.mxu0 0
    %227 = vmatpush1.bf16.msra.mxu0 0
    %228 = vmatprep.mubr.bf16.mxu0 0
    %229 = vmatmul.mubr.bf16.gmra.mrb[0].mxu0 %v143
    %v230 = vpop.f32.mrb[0].mxu0
    %v231 = vadd.f32 %v147, %v230
    %v232 = vpop.f32.mrb[0].mxu0
    %v233 = vpop.f32.mrb[0].mxu0
    %v234 = vpop.f32.mrb[0].mxu0
    %235 = vdwg.mxu0
    %v236 = vmax.f32 %v231, 0.0
    %v237 = vpack.c.bf16 %v236, %v236
    %v238 = vlaneseq
    %v239 = vshrl.u32 %v238, 7
    %v240 = vsub.s32 0, %v239
    %v241 = vrot.slane %v87, %v240
    %v258 = vunpack.c.l.b16 %v69
    %v259 = vunpack.c.l.b16 %v70
    %v260 = vunpack.c.l.b16 %v71
    %v261 = vunpack.c.l.b16 %v72
    %v262 = vunpack.c.l.b16 %v73
    %v263 = vunpack.c.l.b16 %v74
    %v264 = vunpack.c.l.b16 %v75
    %v265 = vunpack.c.l.b16 %v76
    %v266 = vunpack.c.l.b16 %v77
    %v267 = vunpack.c.l.b16 %v78
    %v268 = vunpack.c.l.b16 %v79
    %v269 = vunpack.c.l.b16 %v80
    %v270 = vunpack.c.l.b16 %v81
    %v271 = vunpack.c.l.b16 %v82
    %v272 = vunpack.c.l.b16 %v83
    %v273 = vunpack.c.l.b16 %v84
    %v274 = vpack.c.b16 %v259, %v258
    %v275 = vpack.c.b16 %v261, %v260
    %v276 = vpack.c.b16 %v263, %v262
    %v277 = vpack.c.b16 %v265, %v264
    %v278 = vpack.c.b16 %v267, %v266
    %v279 = vpack.c.b16 %v269, %v268
    %v280 = vpack.c.b16 %v271, %v270
    %v281 = vpack.c.b16 %v273, %v272
    %290 = vmatprep.subr.bf16.mxu0 0
    %291 = vmatpush1.bf16.msra.mxu0 %v274
    %292 = vmatprep.subr.bf16.mxu0 0
    %293 = vmatpush1.bf16.msra.mxu0 %v275
    %294 = vmatprep.subr.bf16.mxu0 0
    %295 = vmatpush1.bf16.msra.mxu0 %v276
    %296 = vmatprep.subr.bf16.mxu0 0
    %297 = vmatpush1.bf16.msra.mxu0 %v277
    %298 = vmatprep.subr.bf16.mxu0 0
    %299 = vmatpush1.bf16.msra.mxu0 %v278
    %300 = vmatprep.subr.bf16.mxu0 0
    %301 = vmatpush1.bf16.msra.mxu0 %v279
    %302 = vmatprep.subr.bf16.mxu0 0
    %303 = vmatpush1.bf16.msra.mxu0 %v280
    %304 = vmatprep.subr.bf16.mxu0 0
    %305 = vmatpush1.bf16.msra.mxu0 %v281
    %306 = vmatprep.subr.bf16.mxu0 0
    %307 = vmatpush1.bf16.msra.mxu0 0
    %308 = vmatprep.subr.bf16.mxu0 0
    %309 = vmatpush1.bf16.msra.mxu0 0
    %310 = vmatprep.subr.bf16.mxu0 0
    %311 = vmatpush1.bf16.msra.mxu0 0
    %312 = vmatprep.subr.bf16.mxu0 0
    %313 = vmatpush1.bf16.msra.mxu0 0
    %314 = vmatprep.subr.bf16.mxu0 0
    %315 = vmatpush1.bf16.msra.mxu0 0
    %316 = vmatprep.subr.bf16.mxu0 0
    %317 = vmatpush1.bf16.msra.mxu0 0
    %318 = vmatprep.subr.bf16.mxu0 0
    %319 = vmatpush1.bf16.msra.mxu0 0
    %320 = vmatprep.subr.bf16.mxu0 0
    %321 = vmatpush1.bf16.msra.mxu0 0
    %322 = vmatprep.mubr.bf16.mxu0 0
    %323 = vmatmul.mubr.bf16.gmra.mrb[0].mxu0 %v237
    %v324 = vpop.f32.mrb[0].mxu0
    %v325 = vadd.f32 %v241, %v324
    %v326 = vpop.f32.mrb[0].mxu0
    %v327 = vpop.f32.mrb[0].mxu0
    %v328 = vpop.f32.mrb[0].mxu0
    %329 = vdwg.mxu0
    %vm330 = vcmask 58368
    %331 = vst.msk [vmem:[%s3] sm:$0x3] %vm330, %v325
    // Predicated region
    $region26: #{_double_q_forward_impl.1} parent=1 // pred_check
      _
    $region27: #{_double_q_forward_impl.1} parent=1 // pred_check_branch
      %333 = sbr.rel (0) target = $region29
    $region28: #{_double_q_forward_impl.1} parent=1 // pred_region
      _
    $region29: #{_double_q_forward_impl.1} parent=1 // pred_fallthru
      _
    // Predicated region
    $region30: #{_double_q_forward_impl.1} parent=1 // pred_check
      _
    $region31: #{_double_q_forward_impl.1} parent=1 // pred_check_branch
      %335 = sbr.rel (0) target = $region33
    $region32: #{_double_q_forward_impl.1} parent=1 // pred_region
      _
    $region33: #{_double_q_forward_impl.1} parent=1 // pred_fallthru
      _
    %336 = vsyncpa [#allocation3], 1
    %337 = vsyncpa [#allocation5], 1

</llo_original>
